<compile_context>
chip_gen: v7x
topology: tpu7x:2x2x1
jax: 0.10.0
libtpu: 0.0.40
codegen_flags: <defaults>
</compile_context>

<pallas_src>
import functools
import math

import jax
import jax.numpy as jnp
import numpy as np
from jax.experimental import pallas as pl
from jax.experimental.pallas import tpu as pltpu


_NEG_BIG = -1e30  # finite "minus infinity" for padded tag columns


def _round_up(a, b):
    return ((a + b - 1) // b) * b


def _scores_and_argmax(x_ref, w_ref, b_ref, pad_id_is_zero):
    """Shared core: bf16 matmul (f32 acc), bias add, lane-dense argmax."""
    x = x_ref[...].astype(jnp.bfloat16)              # in-kernel cast (hidden under DMA)
    w = w_ref[...]                                   # (H, T_pad) bf16
    b = b_ref[...]                                   # (1, T_pad) f32 (pad cols = _NEG_BIG)

    s = jnp.dot(x, w, preferred_element_type=jnp.float32) + b     # (TILE_N, T_pad)

    # Single transpose so rows live on the lane axis: every reduction below is a
    # lane-dense (1, TILE_N) vector and the tag store is an unmasked vst.
    st = s.T                                                      # (T_pad, TILE_N)
    t_pad, tn = st.shape

    tag_iota = jax.lax.broadcasted_iota(jnp.int32, (t_pad, tn), 0)
    neg_big = jnp.float32(jnp.finfo(jnp.float32).min)

    # Argmax over tags from raw scores (log_softmax does not change the argmax).
    if pad_id_is_zero:
        # torch: max over tags[1:] then +1  ==  full-axis argmax with col 0 masked
        masked = jnp.where(tag_iota >= 1, st, neg_big)
    else:
        masked = st
    mv = jnp.max(masked, axis=0, keepdims=True)                   # (1, TILE_N)
    idx = jnp.min(jnp.where(masked == mv, tag_iota, t_pad),
                  axis=0, keepdims=True)                          # (1, TILE_N)
    return st, idx, tag_iota


def _slot_kernel_eval(x_ref, w_ref, b_ref, tag_ref, *, pad_id_is_zero):
    _, idx, _ = _scores_and_argmax(x_ref, w_ref, b_ref, pad_id_is_zero)
    tn = idx.shape[1]
    tag_ref[...] = idx.reshape(1, 1, tn).astype(jnp.int32)


def _slot_kernel_train(x_ref, w_ref, b_ref, y_ref, tag_ref, loss_ref, *,
                       pad_id_is_zero, n_rows, tile_n):
    st, idx, tag_iota = _scores_and_argmax(x_ref, w_ref, b_ref, pad_id_is_zero)
    t_pad, tn = st.shape
    tag_ref[...] = idx.reshape(1, 1, tn).astype(jnp.int32)

    # Log-softmax only where it matters: the NLL loss term.
    m = jnp.max(st, axis=0, keepdims=True)                        # (1, TILE_N)
    lse = m + jnp.log(jnp.sum(jnp.exp(st - m), axis=0, keepdims=True))
    logp = st - lse                                               # (T_pad, TILE_N)

    y_row = y_ref[...].reshape(1, tn)                             # (1, TILE_N) int32
    onehot = (tag_iota == y_row).astype(jnp.float32)              # (T_pad, TILE_N)
    per_row = jnp.sum(logp * onehot, axis=0, keepdims=True)       # (1, TILE_N) = log p(y_n)

    # Mask out the ragged remainder rows of the last tile. jnp.where (not multiply)
    # so any NaN/Inf coming from the unspecified OOB rows of x is dropped, not kept.
    col = jax.lax.broadcasted_iota(jnp.int32, (1, tn), 1)
    valid = (pl.program_id(0) * tile_n + col) < n_rows
    per_row = jnp.where(valid, per_row, jnp.float32(0.0))

    partial = -jnp.sum(per_row, axis=1, keepdims=True)            # (1, 1) partial NLL sum
    loss_ref[...] = partial.reshape(1, 1, 1)


def _choose_tile_n(N, H, tile_n):
    if tile_n is not None:
        return max(16, _round_up(min(tile_n, _round_up(N, 16)), 16))
    target_bytes = 4 << 20                               # ~4 MB f32 x tile per step
    tn = max(512, min(4096, target_bytes // (H * 4)))
    tn = _round_up(tn, 16)                               # bf16 (16,128) tiling friendly
    tn = min(tn, _round_up(N, 16))
    # v7x megacore: make sure both TensorCores get work when there is enough of it.
    if N >= 2048 and pl.cdiv(N, tn) < 2:
        tn = _round_up(pl.cdiv(N, 2), 16)
    return max(16, tn)


def slot_classify_forward(x, w_ht, bias, y=None, *, training=False,
                          pad_id_is_zero=True, tile_n=None):
    """x: (B,S,H) f32; w_ht: (H,T) f32 (transposed torch Linear weight);
    bias: (T,) f32; y: (B,S) int (only used when training)."""
    B, S, H = x.shape
    T = w_ht.shape[1]
    N = B * S
    if pad_id_is_zero and T < 2:
        raise ValueError("pad_id_is_zero requires num_tags >= 2")

    # ---- tiling choices -------------------------------------------------
    tn = _choose_tile_n(N, H, tile_n)
    num_tiles = pl.cdiv(N, tn)                          # ragged last tile, masked in-kernel
    T_pad = _round_up(T, 128)                           # lane-pad the tag axis (no wider)

    # ---- operand prep (x stays f32; only the tiny W/bias/labels are touched) ----
    xf = x.reshape(N, H)                                # free reshape, no cast, no pad
    wf = w_ht.astype(jnp.bfloat16)
    bf = bias.astype(jnp.float32).reshape(1, T)
    if T_pad != T:
        wf = jnp.pad(wf, ((0, 0), (0, T_pad - T)))
        bf = jnp.pad(bf, ((0, 0), (0, T_pad - T)), constant_values=_NEG_BIG)

    train = bool(training and y is not None)

    # ---- VMEM budget computed from the actual tile sizes ----------------
    est_vmem = (2 * tn * H * 4            # double-buffered f32 x tiles
                + 2 * H * T_pad * 2       # resident W (bf16, + spare buffer)
                + 2 * T_pad * 4           # resident bias
                + 4 * tn * T_pad * 4      # s / s.T f32 intermediates + slack
                + 4 * tn * 4)             # labels / tags / loss tiles
    vmem_limit = int(min(48 << 20, max(24 << 20, 2 * est_vmem)))

    # ---- cost estimate so XLA overlaps neighbors with this mem-bound call ----
    bytes_accessed = N * H * 4 + H * T_pad * 2 + T_pad * 4 + num_tiles * tn * 4
    if train:
        bytes_accessed += num_tiles * tn * 4 + num_tiles * 4
    cost = pl.CostEstimate(
        flops=2 * N * H * T_pad,
        transcendentals=(N * T_pad) if train else 0,
        bytes_accessed=int(bytes_accessed),
    )

    x_spec = pl.BlockSpec((tn, H), lambda i: (i, 0))            # x: tiled over rows
    w_spec = pl.BlockSpec((H, T_pad), lambda i: (0, 0))         # W: VMEM resident
    b_spec = pl.BlockSpec((1, T_pad), lambda i: (0, 0))         # bias: VMEM resident
    tag_spec = pl.BlockSpec((1, 1, tn), lambda i: (i, 0, 0))    # tags: lane-dense

    if train:
        yf = y.reshape(N).astype(jnp.int32)
        if num_tiles * tn != N:
            yf = jnp.pad(yf, (0, num_tiles * tn - N))           # tiny int32 pad only
        yf = yf.reshape(num_tiles, 1, tn)                       # lane-dense labels

        kernel = functools.partial(_slot_kernel_train,
                                   pad_id_is_zero=pad_id_is_zero,
                                   n_rows=N, tile_n=tn)
        in_specs = [x_spec, w_spec, b_spec,
                    pl.BlockSpec((1, 1, tn), lambda i: (i, 0, 0))]
        out_specs = [tag_spec, pl.BlockSpec((1, 1, 1), lambda i: (i, 0, 0))]
        out_shape = (jax.ShapeDtypeStruct((num_tiles, 1, tn), jnp.int32),
                     jax.ShapeDtypeStruct((num_tiles, 1, 1), jnp.float32))
        operands = (xf, wf, bf, yf)
    else:
        kernel = functools.partial(_slot_kernel_eval,
                                   pad_id_is_zero=pad_id_is_zero)
        in_specs = [x_spec, w_spec, b_spec]
        out_specs = [tag_spec]
        out_shape = (jax.ShapeDtypeStruct((num_tiles, 1, tn), jnp.int32),)
        operands = (xf, wf, bf)

    grid_spec = pltpu.PrefetchScalarGridSpec(
        num_scalar_prefetch=0,
        grid=(num_tiles,),
        in_specs=in_specs,
        out_specs=out_specs,
    )

    outs = pl.pallas_call(
        kernel,
        out_shape=out_shape,
        grid_spec=grid_spec,
        compiler_params=pltpu.CompilerParams(
            dimension_semantics=("parallel",),        # no carried state -> both TCs on v7x
            vmem_limit_bytes=vmem_limit),
        cost_estimate=cost,
    )(*operands)

    tag_tiles = outs[0]
    tag_result = tag_tiles.reshape(num_tiles * tn)[:N].reshape(B, S)
    if train:
        loss = jnp.sum(outs[1]) / jnp.float32(N)      # NLLLoss(mean) over all B*S rows
    else:
        loss = jnp.zeros((), jnp.float32)
    return tag_result, loss.reshape(1)


def _reference(x, w_ht, bias, y, training, pad_id_is_zero):
    """Plain-JAX reference mirroring the torch forward (bf16 matmul to match kernel)."""
    B, S, H = x.shape
    T = w_ht.shape[1]
    s = jnp.dot(x.reshape(-1, H).astype(jnp.bfloat16), w_ht.astype(jnp.bfloat16),
                preferred_element_type=jnp.float32).reshape(B, S, T)
    s = s + bias[None, None, :].astype(jnp.float32)
    scores = jax.nn.log_softmax(s, axis=2) if training else s
    if pad_id_is_zero:
        tag = jnp.argmax(scores[:, :, 1:], axis=2) + 1
    else:
        tag = jnp.argmax(scores, axis=2)
    if training and y is not None:
        logp = scores.reshape(-1, T)
        yf = y.reshape(-1)
        loss = -jnp.mean(logp[jnp.arange(yf.shape[0]), yf])
    else:
        loss = jnp.zeros((), jnp.float32)
    return tag.astype(jnp.int32), loss


if __name__ == "__main__":
    label2id = {"[PAD]": 0}                 # -> pad_id_is_zero = True
    pad_id_is_zero = (label2id["[PAD]"] == 0)

    def run_case(B, S, H, T, tile_n, key):
        k_x, k_w, k_b, k_y = jax.random.split(key, 4)
        x = jax.random.normal(k_x, (B, S, H), jnp.float32)
        # deterministic Linear init (torch-style uniform(-1/sqrt(H), 1/sqrt(H)))
        bound = 1.0 / math.sqrt(H)
        w_torch = jax.random.uniform(k_w, (T, H), jnp.float32, -bound, bound)  # torch (out,in)
        bias = jax.random.uniform(k_b, (T,), jnp.float32, -bound, bound)
        w_ht = jnp.transpose(w_torch)                                          # (H, T)
        y = jax.random.randint(k_y, (B, S), 1, T, dtype=jnp.int32)

        # eval-mode forward (module not training): loss must be [0.0]
        tag_e, loss_e = slot_classify_forward(
            x, w_ht, bias, training=False,
            pad_id_is_zero=pad_id_is_zero, tile_n=tile_n)
        # train-mode forward with labels: log_softmax + NLLLoss
        tag_t, loss_t = slot_classify_forward(
            x, w_ht, bias, y=y, training=True,
            pad_id_is_zero=pad_id_is_zero, tile_n=tile_n)
        jax.block_until_ready((tag_e, loss_e, tag_t, loss_t))

        ref_tag_e, _ = _reference(x, w_ht, bias, None, False, pad_id_is_zero)
        ref_tag_t, ref_loss_t = _reference(x, w_ht, bias, y, True, pad_id_is_zero)

        assert np.array_equal(np.asarray(tag_e), np.asarray(ref_tag_e)), "eval argmax mismatch"
        assert np.array_equal(np.asarray(tag_t), np.asarray(ref_tag_t)), "train argmax mismatch"
        np.testing.assert_allclose(np.asarray(loss_e), np.array([0.0], np.float32), atol=1e-6)
        np.testing.assert_allclose(np.asarray(loss_t)[0], np.asarray(ref_loss_t),
                                   rtol=1e-3, atol=1e-3)

    key = jax.random.PRNGKey(0)
    k0, k1 = jax.random.split(key, 2)
    # case 1: auto-tiled single tile (small shapes consistent with (batch, seq, n_in) -> num_tags)
    run_case(2, 8, 32, 10, None, k0)
    # case 2: forced tile_n=16 -> 2 tiles with a ragged last tile
    #         (exercises multi-tile pipelining + NaN-safe loss/argmax masking path)
    run_case(2, 9, 32, 10, 16, k1)

    print("KERNEL_OK")
</pallas_src>

<mosaic_0001>
module attributes {stable_mosaic.version = 11 : i64} {
  func.func @_slot_kernel_eval(%arg0: i32, %arg1: memref<16x32xf32, #tpu.memory_space<vmem>>, %arg2: memref<32x128xbf16, #tpu.memory_space<vmem>>, %arg3: memref<1x128xf32, #tpu.memory_space<vmem>>, %arg4: memref<1x1x16xi32, #tpu.memory_space<vmem>>) attributes {dimension_semantics = [#tpu.dimension_semantics<parallel>], iteration_bounds = array<i64: 1>, scalar_prefetch = 0 : i64, scratch_operands = 0 : i64, tpu.core_type = #tpu.core_type<tc>, window_params = [{transform_indices = @transform_0, window_bounds = array<i64: 16, 32>}, {pipeline_mode = #tpu.pipeline_mode<synchronous>, transform_indices = @transform_1, window_bounds = array<i64: 32, 128>}, {pipeline_mode = #tpu.pipeline_mode<synchronous>, transform_indices = @transform_2, window_bounds = array<i64: 1, 128>}, {transform_indices = @transform_3, window_bounds = array<i64: 1, 1, 16>}]} {
    %c0 = arith.constant 0 : index
    %c0_0 = arith.constant 0 : index
    %0 = vector.load %arg1[%c0, %c0_0] : memref<16x32xf32, #tpu.memory_space<vmem>>, vector<16x32xf32>
    %1 = arith.truncf %0 : vector<16x32xf32> to vector<16x32xbf16>
    %c0_1 = arith.constant 0 : index
    %c0_2 = arith.constant 0 : index
    %2 = vector.load %arg2[%c0_1, %c0_2] : memref<32x128xbf16, #tpu.memory_space<vmem>>, vector<32x128xbf16>
    %c0_3 = arith.constant 0 : index
    %c0_4 = arith.constant 0 : index
    %3 = vector.load %arg3[%c0_3, %c0_4] : memref<1x128xf32, #tpu.memory_space<vmem>>, vector<1x128xf32>
    %cst = arith.constant dense<0.000000e+00> : vector<16x128xf32>
    %4 = tpu.matmul %1, %2, %cst {dimension_numbers = #tpu.dot_dimension_numbers<[1], [0], [0], [1], [0, 0, 1, 1], [], []>} : vector<16x32xbf16>, vector<32x128xbf16>, vector<16x128xf32> -> vector<16x128xf32>
    %5 = vector.broadcast %3 : vector<1x128xf32> to vector<16x128xf32>
    %6 = arith.addf %4, %5 : vector<16x128xf32>
    %7 = tpu.transpose %6, [1, 0] : vector<16x128xf32> -> vector<128x16xf32>
    %8 = tpu.iota {dimensions = array<i32: 0>} : vector<128x16xi32>
    %c1_i32 = arith.constant 1 : i32
    %9 = vector.broadcast %c1_i32 : i32 to vector<128x16xi32>
    %10 = arith.cmpi sge, %8, %9 : vector<128x16xi32>
    %cst_5 = arith.constant -3.40282347E+38 : f32
    %11 = vector.broadcast %cst_5 : f32 to vector<128x16xf32>
    %12 = arith.select %10, %7, %11 : vector<128x16xi1>, vector<128x16xf32>
    %cst_6 = arith.constant dense<0xFF800000> : vector<16xf32>
    %13 = vector.multi_reduction <maximumf>, %12, %cst_6 [0] : vector<128x16xf32> to vector<16xf32>
    %14 = vector.shape_cast %13 : vector<16xf32> to vector<1x16xf32>
    %15 = vector.broadcast %14 : vector<1x16xf32> to vector<128x16xf32>
    %16 = arith.cmpf oeq, %12, %15 : vector<128x16xf32>
    %c128_i32 = arith.constant 128 : i32
    %17 = vector.broadcast %c128_i32 : i32 to vector<128x16xi32>
    %18 = arith.select %16, %8, %17 : vector<128x16xi1>, vector<128x16xi32>
    %cst_7 = arith.constant dense<2147483647> : vector<16xi32>
    %19 = vector.multi_reduction <minsi>, %18, %cst_7 [0] : vector<128x16xi32> to vector<16xi32>
    %20 = vector.shape_cast %19 : vector<16xi32> to vector<1x16xi32>
    %21 = vector.shape_cast %20 : vector<1x16xi32> to vector<1x1x16xi32>
    %c0_8 = arith.constant 0 : index
    %c0_9 = arith.constant 0 : index
    %c0_10 = arith.constant 0 : index
    %22 = vector.load %arg4[%c0_8, %c0_9, %c0_10] : memref<1x1x16xi32, #tpu.memory_space<vmem>>, vector<1x1x16xi32>
    tpu.vector_store %arg4[%c0_8, %c0_9, %c0_10], %21 {strides = array<i32>} : memref<1x1x16xi32, #tpu.memory_space<vmem>>, vector<1x1x16xi32>,
    return
  }
  func.func @transform_0(%arg0: i32) -> (i32, i32) {
    %c0_i32 = arith.constant 0 : i32
    %c0_i32_0 = arith.constant 0 : i32
    return %arg0, %c0_i32 : i32, i32
  }
  func.func @transform_1(%arg0: i32) -> (i32, i32) {
    %c0_i32 = arith.constant 0 : i32
    %c0_i32_0 = arith.constant 0 : i32
    %c0_i32_1 = arith.constant 0 : i32
    return %c0_i32, %c0_i32_0 : i32, i32
  }
  func.func @transform_2(%arg0: i32) -> (i32, i32) {
    %c0_i32 = arith.constant 0 : i32
    %c0_i32_0 = arith.constant 0 : i32
    %c0_i32_1 = arith.constant 0 : i32
    return %c0_i32, %c0_i32_0 : i32, i32
  }
  func.func @transform_3(%arg0: i32) -> (i32, i32, i32) {
    %c0_i32 = arith.constant 0 : i32
    %c0_i32_0 = arith.constant 0 : i32
    %c0_i32_1 = arith.constant 0 : i32
    return %arg0, %c0_i32, %c0_i32_0 : i32, i32, i32
  }
}

</mosaic_0001>

<llo_original>
// kernel: tpu_custom_call.1
$region0: #{tpu_custom_call.1}
  #allocation0 [shape = 'u32[]', space=smem, size = 0x4, offset = 0x4, fixed_abs, tag = 'smem constant byte address 0x4 - core index']
  #allocation1 [shape = 'u32[144,128]{1,0:T(1,128)}', space=vmem, size = 0x12000, scoped, tag = 'internal scratch']
  %s0 = inlined_call_operand.hbm [shape: f32[16,32], index: 0, kind: input, shape index: {}]
  %s1 = inlined_call_operand.hbm [shape: bf16[32,128], index: 1, kind: input, shape index: {}]
  %s2 = inlined_call_operand.vmem [shape: f32[1,128], index: 2, kind: input, shape index: {}]
  %s3 = inlined_call_operand.hbm [shape: s32[1,1,16], index: 3, kind: output, shape index: {}]
  %s4 = sld [smem:[#allocation0]]
  $region30: #{tpu_custom_call.1} parent=0
    _
  %s6 = ssub.s32 1, %s4
  %s7 = scalar_select 0, %s6, %s4
  $region1: #{tpu_custom_call.1} parent=0
    #allocation2 [shape = 'u8[8192]{0}', space=vmem, size = 0x2000, scoped, tag = 'input window, operand 0, single buffered']
    #allocation3 [shape = 's32[1]{0}', space=sflag, size = 0x4, scoped, tag = 'scoped memory for tpu_custom_call.1']
    #allocation4 [shape = 's32[1]{0}', space=sflag, size = 0x4, scoped, tag = 'scoped memory for tpu_custom_call.1']
    #allocation5 [shape = 'u8[8192]{0}', space=vmem, size = 0x2000, scoped, tag = 'input window, operand 1, single buffered']
    #allocation6 [shape = 's32[1]{0}', space=sflag, size = 0x4, scoped, tag = 'scoped memory for tpu_custom_call.1']
    #allocation7 [shape = 'u8[512]{0}', space=vmem, size = 0x400, scoped, tag = 'output window, operand 0, single buffered']
    %8 = vsyncpa [#allocation3], 0
    %9 = vsyncpa [#allocation6], 0
    %10 = vsyncpa [#allocation4], 0
    // Predicated region
    $region2: #{tpu_custom_call.1} parent=1 // pred_check
      _
    $region3: #{tpu_custom_call.1} parent=1 // pred_check_branch
      %12 = sbr.rel (0) target = $region5
    $region4: #{tpu_custom_call.1} parent=1 // pred_region
      %s14 = ssub.s32 256, 256
      %15 = vsyncadd [#allocation3], %s14
      %s16 = sshll.u32 [#allocation2], 4
      %s17 = int_to_ptr.vmem [resolvable:$true] %s16
      %22 = dma.hbm_to_vmem [thread:$0]  %s0, 256, %s17, [#allocation3], 128, 128, 8
    $region5: #{tpu_custom_call.1} parent=1 // pred_fallthru
      _
    // Predicated region
    $region6: #{tpu_custom_call.1} parent=1 // pred_check
      _
    $region7: #{tpu_custom_call.1} parent=1 // pred_check_branch
      %24 = sbr.rel (0) target = $region9
    $region8: #{tpu_custom_call.1} parent=1 // pred_region
      %s26 = ssub.s32 256, 256
      %27 = vsyncadd [#allocation6], %s26
      %s28 = sshll.u32 [#allocation5], 4
      %s29 = int_to_ptr.vmem [resolvable:$true] %s28
      %34 = dma.hbm_to_vmem [thread:$0]  %s1, 256, %s29, [#allocation6], 64, 64, 4
    $region9: #{tpu_custom_call.1} parent=1 // pred_fallthru
      _
    // Predicated region
    $region10: #{tpu_custom_call.1} parent=1 // pred_check
      _
    $region11: #{tpu_custom_call.1} parent=1 // pred_check_branch
      %36 = sbr.rel (0) target = $region13
    $region12: #{tpu_custom_call.1} parent=1 // pred_region
      _
    $region13: #{tpu_custom_call.1} parent=1 // pred_fallthru
      _
    // Predicated region
    $region14: #{tpu_custom_call.1} parent=1 // pred_check
      _
    $region15: #{tpu_custom_call.1} parent=1 // pred_check_branch
      %38 = sbr.rel (0) target = $region17
    $region16: #{tpu_custom_call.1} parent=1 // pred_region
      %39 = dma.done [#allocation3], 256
    $region17: #{tpu_custom_call.1} parent=1 // pred_fallthru
      _
    // Predicated region
    $region18: #{tpu_custom_call.1} parent=1 // pred_check
      _
    $region19: #{tpu_custom_call.1} parent=1 // pred_check_branch
      %41 = sbr.rel (0) target = $region21
    $region20: #{tpu_custom_call.1} parent=1 // pred_region
      %42 = dma.done [#allocation6], 256
    $region21: #{tpu_custom_call.1} parent=1 // pred_fallthru
      _
    %v44 = vld [vmem:[#allocation2] sm:$0xff]
    %v45 = vld [vmem:[#allocation2 + $0x8] sm:$0xff]
    %v46 = vpack.c.bf16 %v45, %v44
    %v47 = vld [vmem:[#allocation5] sm:$0xf]
    %v48 = vld [vmem:[#allocation5 + $0x4] sm:$0xf]
    %v49 = vld [vmem:[#allocation5 + $0x8] sm:$0xf]
    %v50 = vld [vmem:[#allocation5 + $0xc] sm:$0xf]
    %v51 = vld [vmem:[%s2] sm:$0x1]
    %v53 = vlaneseq
    %v54 = vshrl.u32 %v53, 7
    %v55 = vsub.s32 0, %v54
    %v56 = vrot.slane %v51, %v55
    %v62 = vunpack.c.l.b16 %v47
    %v63 = vunpack.c.l.b16 %v48
    %v64 = vunpack.c.l.b16 %v49
    %v65 = vunpack.c.l.b16 %v50
    %v66 = vpack.c.b16 %v63, %v62
    %v67 = vpack.c.b16 %v65, %v64
    %vm70 = vcmask 261120
    %v72 = vsel %vm70, %v46, 0
    %74 = vmatprep.subr.bf16.mxu0 0
    %75 = vmatpush1.bf16.msra.mxu0 %v66
    %76 = vmatprep.subr.bf16.mxu0 0
    %77 = vmatpush1.bf16.msra.mxu0 %v67
    %78 = vmatprep.subr.bf16.mxu0 0
    %79 = vmatpush1.bf16.msra.mxu0 0
    %80 = vmatprep.subr.bf16.mxu0 0
    %81 = vmatpush1.bf16.msra.mxu0 0
    %82 = vmatprep.subr.bf16.mxu0 0
    %83 = vmatpush1.bf16.msra.mxu0 0
    %84 = vmatprep.subr.bf16.mxu0 0
    %85 = vmatpush1.bf16.msra.mxu0 0
    %86 = vmatprep.subr.bf16.mxu0 0
    %87 = vmatpush1.bf16.msra.mxu0 0
    %88 = vmatprep.subr.bf16.mxu0 0
    %89 = vmatpush1.bf16.msra.mxu0 0
    %90 = vmatprep.subr.bf16.mxu0 0
    %91 = vmatpush1.bf16.msra.mxu0 0
    %92 = vmatprep.subr.bf16.mxu0 0
    %93 = vmatpush1.bf16.msra.mxu0 0
    %94 = vmatprep.subr.bf16.mxu0 0
    %95 = vmatpush1.bf16.msra.mxu0 0
    %96 = vmatprep.subr.bf16.mxu0 0
    %97 = vmatpush1.bf16.msra.mxu0 0
    %98 = vmatprep.subr.bf16.mxu0 0
    %99 = vmatpush1.bf16.msra.mxu0 0
    %100 = vmatprep.subr.bf16.mxu0 0
    %101 = vmatpush1.bf16.msra.mxu0 0
    %102 = vmatprep.subr.bf16.mxu0 0
    %103 = vmatpush1.bf16.msra.mxu0 0
    %104 = vmatprep.subr.bf16.mxu0 0
    %105 = vmatpush1.bf16.msra.mxu0 0
    %106 = vmatprep.mubr.bf16.mxu0 0
    %107 = vmatmul.mubr.bf16.gmra.mrb[0].mxu0 %v72
    %v108 = vpop.f32.mrb[0].mxu0
    %v109 = vadd.f32 %v56, %v108
    %v110 = vpop.f32.mrb[0].mxu0
    %v111 = vpop.f32.mrb[0].mxu0
    %v112 = vadd.f32 %v56, %v111
    %v113 = vpop.f32.mrb[0].mxu0
    %114 = vdwg.mxu0
    %115 = vxpose.xlu0.b32.start [1/16] %v109, 128
    %116 = vxpose.xlu0.b32.cont [2/16] %v112, 128
    %117 = vxpose.xlu0.b32.cont [3/16] 0.0, 128
    %118 = vxpose.xlu0.b32.cont [4/16] 0.0, 128
    %119 = vxpose.xlu0.b32.cont [5/16] 0.0, 128
    %120 = vxpose.xlu0.b32.cont [6/16] 0.0, 128
    %121 = vxpose.xlu0.b32.cont [7/16] 0.0, 128
    %122 = vxpose.xlu0.b32.cont [8/16] 0.0, 128
    %123 = vxpose.xlu0.b32.cont [9/16] 0.0, 128
    %124 = vxpose.xlu0.b32.cont [10/16] 0.0, 128
    %125 = vxpose.xlu0.b32.cont [11/16] 0.0, 128
    %126 = vxpose.xlu0.b32.cont [12/16] 0.0, 128
    %127 = vxpose.xlu0.b32.cont [13/16] 0.0, 128
    %128 = vxpose.xlu0.b32.cont [14/16] 0.0, 128
    %129 = vxpose.xlu0.b32.cont [15/16] 0.0, 128
    %130 = vxpose.xlu0.b32.end [16/16] 0.0, 128
    %v131 = vpop.trf.xlu0
    %v132 = vpop.trf.xlu0
    %v133 = vpop.trf.xlu0
    %v134 = vpop.trf.xlu0
    %v135 = vpop.trf.xlu0
    %v136 = vpop.trf.xlu0
    %v137 = vpop.trf.xlu0
    %v138 = vpop.trf.xlu0
    %v139 = vpop.trf.xlu0
    %v140 = vpop.trf.xlu0
    %v141 = vpop.trf.xlu0
    %v142 = vpop.trf.xlu0
    %v143 = vpop.trf.xlu0
    %v144 = vpop.trf.xlu0
    %v145 = vpop.trf.xlu0
    %v146 = vpop.trf.xlu0
    %v147 = vlaneseq
    %v148 = vshrl.u32 %v147, 7
    %v149 = vadd.s32 %v148, 8
    %v150 = vadd.s32 %v148, 16
    %v151 = vadd.s32 %v148, 24
    %v152 = vadd.s32 %v148, 32
    %v153 = vadd.s32 %v148, 40
    %v154 = vadd.s32 %v148, 48
    %v155 = vadd.s32 %v148, 56
    %v156 = vadd.s32 %v148, 64
    %v157 = vadd.s32 %v148, 72
    %v158 = vadd.s32 %v148, 80
    %v159 = vadd.s32 %v148, 88
    %v160 = vadd.s32 %v148, 96
    %v161 = vadd.s32 %v148, 104
    %v162 = vadd.s32 %v148, 112
    %v163 = vadd.s32 %v148, 120
    %vm164 = vcmp.ge.s32.totalorder %v148, 1
    %vm165 = vcmp.ge.s32.totalorder %v149, 1
    %vm166 = vcmp.ge.s32.totalorder %v150, 1
    %vm167 = vcmp.ge.s32.totalorder %v151, 1
    %vm168 = vcmp.ge.s32.totalorder %v152, 1
    %vm169 = vcmp.ge.s32.totalorder %v153, 1
    %vm170 = vcmp.ge.s32.totalorder %v154, 1
    %vm171 = vcmp.ge.s32.totalorder %v155, 1
    %vm172 = vcmp.ge.s32.totalorder %v156, 1
    %vm173 = vcmp.ge.s32.totalorder %v157, 1
    %vm174 = vcmp.ge.s32.totalorder %v158, 1
    %vm175 = vcmp.ge.s32.totalorder %v159, 1
    %vm176 = vcmp.ge.s32.totalorder %v160, 1
    %vm177 = vcmp.ge.s32.totalorder %v161, 1
    %vm178 = vcmp.ge.s32.totalorder %v162, 1
    %vm179 = vcmp.ge.s32.totalorder %v163, 1
    %v180 = vsel %vm164, %v131, -3.4028235e+38
    %v181 = vsel %vm165, %v132, -3.4028235e+38
    %v182 = vsel %vm166, %v133, -3.4028235e+38
    %v183 = vsel %vm167, %v134, -3.4028235e+38
    %v184 = vsel %vm168, %v135, -3.4028235e+38
    %v185 = vsel %vm169, %v136, -3.4028235e+38
    %v186 = vsel %vm170, %v137, -3.4028235e+38
    %v187 = vsel %vm171, %v138, -3.4028235e+38
    %v188 = vsel %vm172, %v139, -3.4028235e+38
    %v189 = vsel %vm173, %v140, -3.4028235e+38
    %v190 = vsel %vm174, %v141, -3.4028235e+38
    %v191 = vsel %vm175, %v142, -3.4028235e+38
    %v192 = vsel %vm176, %v143, -3.4028235e+38
    %v193 = vsel %vm177, %v144, -3.4028235e+38
    %v194 = vsel %vm178, %v145, -3.4028235e+38
    %v195 = vsel %vm179, %v146, -3.4028235e+38
    %vm196 = vcmask 130048
    %v197 = vsel %vm196, %v180, -inf
    %v198 = vsel %vm196, %v181, -inf
    %v199 = vsel %vm196, %v182, -inf
    %v200 = vsel %vm196, %v183, -inf
    %v201 = vsel %vm196, %v184, -inf
    %v202 = vmax.f32 %v197, %v201
    %v203 = vsel %vm196, %v185, -inf
    %v204 = vmax.f32 %v198, %v203
    %v205 = vsel %vm196, %v186, -inf
    %v206 = vmax.f32 %v199, %v205
    %v207 = vsel %vm196, %v187, -inf
    %v208 = vmax.f32 %v200, %v207
    %v209 = vsel %vm196, %v188, -inf
    %v210 = vmax.f32 %v202, %v209
    %v211 = vsel %vm196, %v189, -inf
    %v212 = vmax.f32 %v204, %v211
    %v213 = vsel %vm196, %v190, -inf
    %v214 = vmax.f32 %v206, %v213
    %v215 = vsel %vm196, %v191, -inf
    %v216 = vmax.f32 %v208, %v215
    %v217 = vsel %vm196, %v192, -inf
    %v218 = vmax.f32 %v210, %v217
    %v219 = vsel %vm196, %v193, -inf
    %v220 = vmax.f32 %v212, %v219
    %v221 = vsel %vm196, %v194, -inf
    %v222 = vmax.f32 %v214, %v221
    %v223 = vsel %vm196, %v195, -inf
    %v224 = vmax.f32 %v216, %v223
    %v225 = vmax.f32 %v218, %v220
    %v226 = vmax.f32 %v222, %v224
    %v227 = vmax.f32 %v225, %v226
    %v228 = vrot.slane %v227, 4
    %v229 = vmax.f32 %v227, %v228
    %v230 = vrot.slane %v229, 2
    %v231 = vmax.f32 %v229, %v230
    %v232 = vrot.slane %v231, 1
    %v233 = vmax.f32 %v231, %v232
    %vm234 = vcmp.eq.f32.partialorder %v180, %v233
    %vm235 = vcmp.eq.f32.partialorder %v181, %v233
    %vm236 = vcmp.eq.f32.partialorder %v182, %v233
    %vm237 = vcmp.eq.f32.partialorder %v183, %v233
    %vm238 = vcmp.eq.f32.partialorder %v184, %v233
    %vm239 = vcmp.eq.f32.partialorder %v185, %v233
    %vm240 = vcmp.eq.f32.partialorder %v186, %v233
    %vm241 = vcmp.eq.f32.partialorder %v187, %v233
    %vm242 = vcmp.eq.f32.partialorder %v188, %v233
    %vm243 = vcmp.eq.f32.partialorder %v189, %v233
    %vm244 = vcmp.eq.f32.partialorder %v190, %v233
    %vm245 = vcmp.eq.f32.partialorder %v191, %v233
    %vm246 = vcmp.eq.f32.partialorder %v192, %v233
    %vm247 = vcmp.eq.f32.partialorder %v193, %v233
    %vm248 = vcmp.eq.f32.partialorder %v194, %v233
    %vm249 = vcmp.eq.f32.partialorder %v195, %v233
    %v250 = vsel %vm234, %v148, 128
    %v251 = vsel %vm235, %v149, 128
    %v252 = vsel %vm236, %v150, 128
    %v253 = vsel %vm237, %v151, 128
    %v254 = vsel %vm238, %v152, 128
    %v255 = vsel %vm239, %v153, 128
    %v256 = vsel %vm240, %v154, 128
    %v257 = vsel %vm241, %v155, 128
    %v258 = vsel %vm242, %v156, 128
    %v259 = vsel %vm243, %v157, 128
    %v260 = vsel %vm244, %v158, 128
    %v261 = vsel %vm245, %v159, 128
    %v262 = vsel %vm246, %v160, 128
    %v263 = vsel %vm247, %v161, 128
    %v264 = vsel %vm248, %v162, 128
    %v265 = vsel %vm249, %v163, 128
    %v266 = vsel %vm196, %v250, 2147483647
    %v267 = vsel %vm196, %v251, 2147483647
    %v268 = vsel %vm196, %v252, 2147483647
    %v269 = vsel %vm196, %v253, 2147483647
    %v270 = vsel %vm196, %v254, 2147483647
    %vm271 = vcmp.lt.s32.totalorder %v266, %v270
    %v272 = vsel %vm271, %v266, %v270
    %v273 = vsel %vm196, %v255, 2147483647
    %vm274 = vcmp.lt.s32.totalorder %v267, %v273
    %v275 = vsel %vm274, %v267, %v273
    %v276 = vsel %vm196, %v256, 2147483647
    %vm277 = vcmp.lt.s32.totalorder %v268, %v276
    %v278 = vsel %vm277, %v268, %v276
    %v279 = vsel %vm196, %v257, 2147483647
    %vm280 = vcmp.lt.s32.totalorder %v269, %v279
    %v281 = vsel %vm280, %v269, %v279
    %v282 = vsel %vm196, %v258, 2147483647
    %vm283 = vcmp.lt.s32.totalorder %v272, %v282
    %v284 = vsel %vm283, %v272, %v282
    %v285 = vsel %vm196, %v259, 2147483647
    %vm286 = vcmp.lt.s32.totalorder %v275, %v285
    %v287 = vsel %vm286, %v275, %v285
    %v288 = vsel %vm196, %v260, 2147483647
    %vm289 = vcmp.lt.s32.totalorder %v278, %v288
    %v290 = vsel %vm289, %v278, %v288
    %v291 = vsel %vm196, %v261, 2147483647
    %vm292 = vcmp.lt.s32.totalorder %v281, %v291
    %v293 = vsel %vm292, %v281, %v291
    %v294 = vsel %vm196, %v262, 2147483647
    %vm295 = vcmp.lt.s32.totalorder %v284, %v294
    %v296 = vsel %vm295, %v284, %v294
    %v297 = vsel %vm196, %v263, 2147483647
    %vm298 = vcmp.lt.s32.totalorder %v287, %v297
    %v299 = vsel %vm298, %v287, %v297
    %v300 = vsel %vm196, %v264, 2147483647
    %vm301 = vcmp.lt.s32.totalorder %v290, %v300
    %v302 = vsel %vm301, %v290, %v300
    %v303 = vsel %vm196, %v265, 2147483647
    %vm304 = vcmp.lt.s32.totalorder %v293, %v303
    %v305 = vsel %vm304, %v293, %v303
    %vm306 = vcmp.lt.s32.totalorder %v296, %v299
    %v307 = vsel %vm306, %v296, %v299
    %vm308 = vcmp.lt.s32.totalorder %v302, %v305
    %v309 = vsel %vm308, %v302, %v305
    %vm310 = vcmp.lt.s32.totalorder %v307, %v309
    %v311 = vsel %vm310, %v307, %v309
    %v312 = vrot.slane %v311, 4
    %vm313 = vcmp.lt.s32.totalorder %v311, %v312
    %v314 = vsel %vm313, %v311, %v312
    %v315 = vrot.slane %v314, 2
    %vm316 = vcmp.lt.s32.totalorder %v314, %v315
    %v317 = vsel %vm316, %v314, %v315
    %v318 = vrot.slane %v317, 1
    %vm319 = vcmp.lt.s32.totalorder %v317, %v318
    %v320 = vsel %vm319, %v317, %v318
    %vm321 = vcmask 122880
    %322 = vst.msk [vmem:[#allocation7] sm:$0x1] %vm321, %v320
    // Predicated region
    $region22: #{tpu_custom_call.1} parent=1 // pred_check
      _
    $region23: #{tpu_custom_call.1} parent=1 // pred_check_branch
      %324 = sbr.rel (0) target = $region25
    $region24: #{tpu_custom_call.1} parent=1 // pred_region
      %s326 = ssub.s32 16, 16
      %327 = vsyncadd [#allocation4], %s326
      %s329 = sshll.u32 [#allocation7], 4
      %s330 = int_to_ptr.vmem [resolvable:$true] %s329
      %332 = dma.vmem_to_hbm [thread:$0]  %s330, 16, %s3, [#allocation4]
    $region25: #{tpu_custom_call.1} parent=1 // pred_fallthru
      _
    // Predicated region
    $region26: #{tpu_custom_call.1} parent=1 // pred_check
      _
    $region27: #{tpu_custom_call.1} parent=1 // pred_check_branch
      %334 = sbr.rel (0) target = $region29
    $region28: #{tpu_custom_call.1} parent=1 // pred_region
      %335 = dma.done [#allocation4], 16
    $region29: #{tpu_custom_call.1} parent=1 // pred_fallthru
      _
    %336 = vsyncpa [#allocation3], 1
    %337 = vsyncpa [#allocation6], 1
    %338 = vsyncpa [#allocation4], 1

</llo_original>
